<compile_context>
chip_gen: v6e
topology: v6e:2x2x1
jax: 0.10.0
libtpu: 0.0.40
codegen_flags: <defaults>
</compile_context>

<pallas_src>
import jax
import jax.numpy as jnp
from jax.experimental import pallas as pl
from jax.experimental.pallas import tpu as pltpu


def _round_up(x, m):
    return (x + m - 1) // m * m


def _tensorcores_per_chip():
    """Best-effort detection of TensorCores per chip (2 on v7x, else 1)."""
    try:
        kind = jax.devices()[0].device_kind.lower()
    except Exception:
        return 1
    return 2 if ("v7" in kind or "tpu7" in kind) else 1


def critic_kernel(s_ref, a_ref, w1_ref, b1_ref, w2_ref, b2_ref, w3_ref,
                  b3_ref, o_ref):
    # Matmul-input dtype follows the weights (bf16 by default, f32 optional);
    # accumulation, bias, ReLU and the output head are always f32.
    cd = w1_ref.dtype

    # torch.cat([state, action], dim=1) fused in-kernel: one lane-select, then
    # ONE MXU pass for layer 1 instead of two tiny-K matmuls.
    x = jnp.concatenate([s_ref[...], a_ref[...]], axis=1).astype(cd)

    # Layer 1: (TB, S+A) @ (S+A, H) + b1, ReLU.
    h1 = jnp.dot(x, w1_ref[...], preferred_element_type=jnp.float32) + b1_ref[...]
    h1 = jnp.maximum(h1, 0.0)

    # Layer 2: (TB, H) @ (H, H) + b2, ReLU.
    h2 = (jnp.dot(h1.astype(cd), w2_ref[...],
                  preferred_element_type=jnp.float32) + b2_ref[...])
    h2 = jnp.maximum(h2, 0.0)

    # Output head: VPU multiply + XLU lane reduce (no 1-column MXU matmul).
    # w3 is a (1, H) row; b3 is an SMEM scalar.  The result is written as a
    # lane-dense (1, 1, TB) row so the store is unmasked.
    q = jnp.sum(h2 * w3_ref[...].astype(jnp.float32), axis=-1) + b3_ref[0]
    o_ref[...] = q.reshape(1, 1, -1).astype(o_ref.dtype)


def critic_forward(state, action, params, *, block_b=1024):
    """state: (B, state_dim), action: (B, action_dim) -> (B, 1) float32."""
    w1, b1, w2, b2, w3, b3 = params
    B, S = state.shape
    A = action.shape[1]
    H = w1.shape[1]

    # Batch tile: as large as the batch allows (the kernel is grid-step /
    # weight-DMA bound), sublane-aligned (multiple of 8).
    cores = _tensorcores_per_chip()
    tb = _round_up(min(block_b, _round_up(B, 8)), 8)
    if cores > 1 and _round_up(B, 8) >= 8 * cores:
        # v7x: make sure the grid has >= `cores` steps so both TensorCores
        # get work under dimension_semantics=("parallel",).
        tb = min(tb, _round_up(pl.cdiv(_round_up(B, 8), cores), 8))

    Bp = _round_up(B, tb)
    if Bp != B:
        pad = Bp - B
        state = jnp.pad(state, ((0, pad), (0, 0)))
        action = jnp.pad(action, ((0, pad), (0, 0)))

    G = Bp // tb

    flops = 2 * Bp * ((S + A) * H + H * H + H)
    bytes_accessed = 4 * Bp * (S + A + 1) + sum(
        int(p.size) * p.dtype.itemsize for p in (w1, b1, w2, b2, w3, b3))

    out = pl.pallas_call(
        critic_kernel,
        # Lane-dense output: batch lives on the lane axis, one row per grid step.
        out_shape=jax.ShapeDtypeStruct((G, 1, tb), jnp.float32),
        grid_spec=pltpu.PrefetchScalarGridSpec(
            num_scalar_prefetch=0,
            grid=(G,),
            in_specs=[
                pl.BlockSpec((tb, S), lambda i: (i, 0)),        # state tile
                pl.BlockSpec((tb, A), lambda i: (i, 0)),        # action tile
                pl.BlockSpec((S + A, H), lambda i: (0, 0)),     # w1 (resident)
                pl.BlockSpec((1, H), lambda i: (0, 0)),         # b1
                pl.BlockSpec((H, H), lambda i: (0, 0)),         # w2 (resident)
                pl.BlockSpec((1, H), lambda i: (0, 0)),         # b2
                pl.BlockSpec((1, H), lambda i: (0, 0)),         # w3 row
                pl.BlockSpec(memory_space=pltpu.MemorySpace.SMEM),  # b3 scalar
            ],
            out_specs=pl.BlockSpec((1, 1, tb), lambda i: (i, 0, 0)),
        ),
        compiler_params=pltpu.CompilerParams(
            # Batch axis is embarrassingly parallel: shards across v7x's 2 TCs.
            dimension_semantics=("parallel",),
            # Safe on v5e/v6e/v7x; allows large batch tiles.
            vmem_limit_bytes=32 * 1024 * 1024,
        ),
        cost_estimate=pl.CostEstimate(
            flops=flops, transcendentals=0, bytes_accessed=bytes_accessed),
    )(state, action, w1, b1, w2, b2, w3, b3)

    # (G, 1, tb) row-major flatten preserves batch order.
    return out.reshape(-1)[:B].reshape(B, 1)


def init_params(key, state_dim, action_dim, hidden_dim,
                matmul_dtype=jnp.bfloat16):
    """bf16 matmul-input weights by default (native on v5e/v6e/v7x MXUs);
    biases stay f32 so all elementwise work is f32."""
    d_in = state_dim + action_dim
    ks = jax.random.split(key, 6)

    def uniform(k, shape, fan_in):
        bound = 1.0 / jnp.sqrt(fan_in)  # matches torch.nn.Linear default init
        return jax.random.uniform(k, shape, jnp.float32, -bound, bound)

    w1 = uniform(ks[0], (d_in, hidden_dim), d_in)
    b1 = uniform(ks[1], (1, hidden_dim), d_in)
    w2 = uniform(ks[2], (hidden_dim, hidden_dim), hidden_dim)
    b2 = uniform(ks[3], (1, hidden_dim), hidden_dim)
    w3 = uniform(ks[4], (1, hidden_dim), hidden_dim)  # row form of the (H,1) head
    b3 = uniform(ks[5], (1,), hidden_dim)             # SMEM scalar

    cast = lambda w: w.astype(matmul_dtype)
    return (cast(w1), b1, cast(w2), b2, cast(w3), b3)


def critic_reference(state, action, params):
    """Pure-JAX f32 reference of the same PyTorch math."""
    w1, b1, w2, b2, w3, b3 = params
    x = jnp.concatenate([state, action], axis=1)
    h1 = jnp.maximum(x @ w1.astype(jnp.float32) + b1, 0.0)
    h2 = jnp.maximum(h1 @ w2.astype(jnp.float32) + b2, 0.0)
    return h2 @ w3.astype(jnp.float32).T + b3


if __name__ == "__main__":
    # BipedalWalker-like dims, module-default hidden=256 (lane-dense), batch=8.
    state_dim, action_dim, hidden_dim, batch = 24, 4, 256, 8

    key = jax.random.PRNGKey(0)
    k_s, k_a, k_p = jax.random.split(key, 3)
    state = jax.random.normal(k_s, (batch, state_dim), jnp.float32)
    action = jax.random.normal(k_a, (batch, action_dim), jnp.float32)

    # f32 matmul path: exact parity with the PyTorch Critic math.
    params_f32 = init_params(k_p, state_dim, action_dim, hidden_dim,
                             matmul_dtype=jnp.float32)
    q = jax.block_until_ready(critic_forward(state, action, params_f32))
    q_ref = critic_reference(state, action, params_f32)
    assert q.shape == (batch, 1)
    assert jnp.allclose(q, q_ref, atol=1e-5, rtol=1e-5)

    # Padding + multi-step grid path (batch not a multiple of the tile).
    batch2 = 40
    k_s2, k_a2 = jax.random.split(jax.random.PRNGKey(1), 2)
    state2 = jax.random.normal(k_s2, (batch2, state_dim), jnp.float32)
    action2 = jax.random.normal(k_a2, (batch2, action_dim), jnp.float32)
    q2 = jax.block_until_ready(
        critic_forward(state2, action2, params_f32, block_b=16))
    q2_ref = critic_reference(state2, action2, params_f32)
    assert q2.shape == (batch2, 1)
    assert jnp.allclose(q2, q2_ref, atol=1e-5, rtol=1e-5)

    # Default bf16 matmul-input path (all generations), f32 accumulation.
    params_bf16 = init_params(k_p, state_dim, action_dim, hidden_dim)
    q_bf = jax.block_until_ready(critic_forward(state, action, params_bf16))
    q_bf_ref = critic_reference(state, action, params_bf16)
    assert q_bf.shape == (batch, 1)
    assert jnp.allclose(q_bf, q_bf_ref, atol=1e-1, rtol=1e-1)

    print("KERNEL_OK")
</pallas_src>

<mosaic_0001>
module attributes {stable_mosaic.version = 11 : i64} {
  func.func @critic_kernel(%arg0: i32, %arg1: memref<8x24xf32, #tpu.memory_space<vmem>>, %arg2: memref<8x4xf32, #tpu.memory_space<vmem>>, %arg3: memref<28x256xf32, #tpu.memory_space<vmem>>, %arg4: memref<1x256xf32, #tpu.memory_space<vmem>>, %arg5: memref<256x256xf32, #tpu.memory_space<vmem>>, %arg6: memref<1x256xf32, #tpu.memory_space<vmem>>, %arg7: memref<1x256xf32, #tpu.memory_space<vmem>>, %arg8: memref<1xf32, #tpu.memory_space<smem>>, %arg9: memref<1x1x8xf32, #tpu.memory_space<vmem>>) attributes {dimension_semantics = [#tpu.dimension_semantics<parallel>], iteration_bounds = array<i64: 1>, scalar_prefetch = 0 : i64, scratch_operands = 0 : i64, tpu.core_type = #tpu.core_type<tc>, window_params = [{transform_indices = @transform_0, window_bounds = array<i64: 8, 24>}, {transform_indices = @transform_1, window_bounds = array<i64: 8, 4>}, {pipeline_mode = #tpu.pipeline_mode<synchronous>, transform_indices = @transform_2, window_bounds = array<i64: 28, 256>}, {pipeline_mode = #tpu.pipeline_mode<synchronous>, transform_indices = @transform_3, window_bounds = array<i64: 1, 256>}, {pipeline_mode = #tpu.pipeline_mode<synchronous>, transform_indices = @transform_4, window_bounds = array<i64: 256, 256>}, {pipeline_mode = #tpu.pipeline_mode<synchronous>, transform_indices = @transform_5, window_bounds = array<i64: 1, 256>}, {pipeline_mode = #tpu.pipeline_mode<synchronous>, transform_indices = @transform_6, window_bounds = array<i64: 1, 256>}, {transform_indices = @transform_7, window_bounds = array<i64: 1>}, {transform_indices = @transform_8, window_bounds = array<i64: 1, 1, 8>}]} {
    %c0 = arith.constant 0 : index
    %c0_0 = arith.constant 0 : index
    %0 = vector.load %arg1[%c0, %c0_0] : memref<8x24xf32, #tpu.memory_space<vmem>>, vector<8x24xf32>
    %c0_1 = arith.constant 0 : index
    %c0_2 = arith.constant 0 : index
    %1 = vector.load %arg2[%c0_1, %c0_2] : memref<8x4xf32, #tpu.memory_space<vmem>>, vector<8x4xf32>
    %2 = tpu.concatenate %0, %1 in 1 : vector<8x24xf32>, vector<8x4xf32> -> vector<8x28xf32>
    %c0_3 = arith.constant 0 : index
    %c0_4 = arith.constant 0 : index
    %3 = vector.load %arg3[%c0_3, %c0_4] : memref<28x256xf32, #tpu.memory_space<vmem>>, vector<28x256xf32>
    %cst = arith.constant dense<0.000000e+00> : vector<8x256xf32>
    %4 = tpu.matmul %2, %3, %cst {dimension_numbers = #tpu.dot_dimension_numbers<[1], [0], [0], [1], [0, 0, 1, 1], [], []>} : vector<8x28xf32>, vector<28x256xf32>, vector<8x256xf32> -> vector<8x256xf32>
    %c0_5 = arith.constant 0 : index
    %c0_6 = arith.constant 0 : index
    %5 = vector.load %arg4[%c0_5, %c0_6] : memref<1x256xf32, #tpu.memory_space<vmem>>, vector<1x256xf32>
    %6 = vector.broadcast %5 : vector<1x256xf32> to vector<8x256xf32>
    %7 = arith.addf %4, %6 : vector<8x256xf32>
    %cst_7 = arith.constant 0.000000e+00 : f32
    %8 = vector.broadcast %cst_7 : f32 to vector<8x256xf32>
    %9 = arith.maximumf %7, %8 : vector<8x256xf32>
    %c0_8 = arith.constant 0 : index
    %c0_9 = arith.constant 0 : index
    %10 = vector.load %arg5[%c0_8, %c0_9] : memref<256x256xf32, #tpu.memory_space<vmem>>, vector<256x256xf32>
    %cst_10 = arith.constant dense<0.000000e+00> : vector<8x256xf32>
    %11 = tpu.matmul %9, %10, %cst_10 {dimension_numbers = #tpu.dot_dimension_numbers<[1], [0], [0], [1], [0, 0, 1, 1], [], []>} : vector<8x256xf32>, vector<256x256xf32>, vector<8x256xf32> -> vector<8x256xf32>
    %c0_11 = arith.constant 0 : index
    %c0_12 = arith.constant 0 : index
    %12 = vector.load %arg6[%c0_11, %c0_12] : memref<1x256xf32, #tpu.memory_space<vmem>>, vector<1x256xf32>
    %13 = vector.broadcast %12 : vector<1x256xf32> to vector<8x256xf32>
    %14 = arith.addf %11, %13 : vector<8x256xf32>
    %cst_13 = arith.constant 0.000000e+00 : f32
    %15 = vector.broadcast %cst_13 : f32 to vector<8x256xf32>
    %16 = arith.maximumf %14, %15 : vector<8x256xf32>
    %c0_14 = arith.constant 0 : index
    %c0_15 = arith.constant 0 : index
    %17 = vector.load %arg7[%c0_14, %c0_15] : memref<1x256xf32, #tpu.memory_space<vmem>>, vector<1x256xf32>
    %18 = vector.broadcast %17 : vector<1x256xf32> to vector<8x256xf32>
    %19 = arith.mulf %16, %18 : vector<8x256xf32>
    %cst_16 = arith.constant dense<0.000000e+00> : vector<8xf32>
    %20 = vector.multi_reduction <add>, %19, %cst_16 [1] : vector<8x256xf32> to vector<8xf32>
    %c0_17 = arith.constant 0 : index
    %21 = memref.load %arg8[%c0_17] : memref<1xf32, #tpu.memory_space<smem>>
    %22 = vector.broadcast %21 : f32 to vector<8xf32>
    %23 = arith.addf %20, %22 : vector<8xf32>
    %24 = vector.shape_cast %23 : vector<8xf32> to vector<1x1x8xf32>
    %c0_18 = arith.constant 0 : index
    %c0_19 = arith.constant 0 : index
    %c0_20 = arith.constant 0 : index
    %25 = vector.load %arg9[%c0_18, %c0_19, %c0_20] : memref<1x1x8xf32, #tpu.memory_space<vmem>>, vector<1x1x8xf32>
    tpu.vector_store %arg9[%c0_18, %c0_19, %c0_20], %24 {strides = array<i32>} : memref<1x1x8xf32, #tpu.memory_space<vmem>>, vector<1x1x8xf32>,
    return
  }
  func.func @transform_0(%arg0: i32) -> (i32, i32) {
    %c0_i32 = arith.constant 0 : i32
    %c0_i32_0 = arith.constant 0 : i32
    return %arg0, %c0_i32 : i32, i32
  }
  func.func @transform_1(%arg0: i32) -> (i32, i32) {
    %c0_i32 = arith.constant 0 : i32
    %c0_i32_0 = arith.constant 0 : i32
    return %arg0, %c0_i32 : i32, i32
  }
  func.func @transform_2(%arg0: i32) -> (i32, i32) {
    %c0_i32 = arith.constant 0 : i32
    %c0_i32_0 = arith.constant 0 : i32
    %c0_i32_1 = arith.constant 0 : i32
    return %c0_i32, %c0_i32_0 : i32, i32
  }
  func.func @transform_3(%arg0: i32) -> (i32, i32) {
    %c0_i32 = arith.constant 0 : i32
    %c0_i32_0 = arith.constant 0 : i32
    %c0_i32_1 = arith.constant 0 : i32
    return %c0_i32, %c0_i32_0 : i32, i32
  }
  func.func @transform_4(%arg0: i32) -> (i32, i32) {
    %c0_i32 = arith.constant 0 : i32
    %c0_i32_0 = arith.constant 0 : i32
    %c0_i32_1 = arith.constant 0 : i32
    return %c0_i32, %c0_i32_0 : i32, i32
  }
  func.func @transform_5(%arg0: i32) -> (i32, i32) {
    %c0_i32 = arith.constant 0 : i32
    %c0_i32_0 = arith.constant 0 : i32
    %c0_i32_1 = arith.constant 0 : i32
    return %c0_i32, %c0_i32_0 : i32, i32
  }
  func.func @transform_6(%arg0: i32) -> (i32, i32) {
    %c0_i32 = arith.constant 0 : i32
    %c0_i32_0 = arith.constant 0 : i32
    %c0_i32_1 = arith.constant 0 : i32
    return %c0_i32, %c0_i32_0 : i32, i32
  }
  func.func @transform_7(%arg0: i32) -> i32 {
    %c0_i32 = arith.constant 0 : i32
    %c0_i32_0 = arith.constant 0 : i32
    return %c0_i32 : i32
  }
  func.func @transform_8(%arg0: i32) -> (i32, i32, i32) {
    %c0_i32 = arith.constant 0 : i32
    %c0_i32_0 = arith.constant 0 : i32
    %c0_i32_1 = arith.constant 0 : i32
    return %arg0, %c0_i32, %c0_i32_0 : i32, i32, i32
  }
}

</mosaic_0001>

<llo_original>
// kernel: tpu_custom_call.1
$region0: #{tpu_custom_call.1}
  #allocation0 [shape = 'u32[]', space=smem, size = 0x4, offset = 0x4, fixed_abs, tag = 'smem constant byte address 0x4 - core index']
  #allocation1 [shape = 'u32[144,128]{1,0:T(1,128)}', space=vmem, size = 0x12000, scoped, tag = 'internal scratch']
  #allocation2 [shape = 'f32[1]{0:T(128)S(6)}', space=smem, size = 0x200, scoped, tag = 'scoped memory for tpu_custom_call.1']
  %s0 = inlined_call_operand.vmem [shape: f32[8,24], index: 0, kind: input, shape index: {}]
  %s1 = inlined_call_operand.vmem [shape: f32[8,4], index: 1, kind: input, shape index: {}]
  %s2 = inlined_call_operand.hbm [shape: f32[28,256], index: 2, kind: input, shape index: {}]
  %s3 = inlined_call_operand.vmem [shape: f32[1,256], index: 3, kind: input, shape index: {}]
  %s4 = inlined_call_operand.hbm [shape: f32[256,256], index: 4, kind: input, shape index: {}]
  %s5 = inlined_call_operand.vmem [shape: f32[1,256], index: 5, kind: input, shape index: {}]
  %s6 = inlined_call_operand.vmem [shape: f32[1,256], index: 6, kind: input, shape index: {}]
  %s7 = inlined_call_operand.<no memory space> [shape: f32[1], index: 7, kind: input, shape index: {}]
  %s8 = inlined_call_operand.hbm [shape: f32[1,1,8], index: 8, kind: output, shape index: {}]
  %s9 = sld [smem:[#allocation0]]
  $region50: #{tpu_custom_call.1} parent=0
    _
  %s11 = ssub.s32 1, %s9
  %s12 = scalar_select 0, %s11, %s9
  %13 = sst [smem:[#allocation2]] %s7
  $region1: #{tpu_custom_call.1} parent=0
    #allocation3 [shape = 'u8[32768]{0}', space=vmem, size = 0x8000, scoped, tag = 'input window, operand 2, single buffered']
    #allocation4 [shape = 's32[1]{0}', space=sflag, size = 0x4, scoped, tag = 'scoped memory for tpu_custom_call.1']
    #allocation5 [shape = 's32[1]{0}', space=sflag, size = 0x4, scoped, tag = 'scoped memory for tpu_custom_call.1']
    #allocation6 [shape = 'u8[262144]{0}', space=vmem, size = 0x40000, scoped, tag = 'input window, operand 4, single buffered']
    #allocation7 [shape = 's32[1]{0}', space=sflag, size = 0x4, scoped, tag = 'scoped memory for tpu_custom_call.1']
    #allocation8 [shape = 'u8[512]{0}', space=vmem, size = 0x400, scoped, tag = 'output window, operand 0, single buffered']
    %14 = vsyncpa [#allocation4], 0
    %15 = vsyncpa [#allocation7], 0
    %16 = vsyncpa [#allocation5], 0
    // Predicated region
    $region2: #{tpu_custom_call.1} parent=1 // pred_check
      _
    $region3: #{tpu_custom_call.1} parent=1 // pred_check_branch
      %18 = sbr.rel (0) target = $region5
    $region4: #{tpu_custom_call.1} parent=1 // pred_region
      _
    $region5: #{tpu_custom_call.1} parent=1 // pred_fallthru
      _
    // Predicated region
    $region6: #{tpu_custom_call.1} parent=1 // pred_check
      _
    $region7: #{tpu_custom_call.1} parent=1 // pred_check_branch
      %20 = sbr.rel (0) target = $region9
    $region8: #{tpu_custom_call.1} parent=1 // pred_region
      _
    $region9: #{tpu_custom_call.1} parent=1 // pred_fallthru
      _
    // Predicated region
    $region10: #{tpu_custom_call.1} parent=1 // pred_check
      _
    $region11: #{tpu_custom_call.1} parent=1 // pred_check_branch
      %22 = sbr.rel (0) target = $region13
    $region12: #{tpu_custom_call.1} parent=1 // pred_region
      %s24 = ssub.s32 1024, 1024
      %25 = vsyncadd [#allocation4], %s24
      %s26 = sshll.u32 [#allocation3], 4
      %s27 = int_to_ptr.vmem [resolvable:$true] %s26
      %32 = dma.hbm_to_vmem [thread:$0]  %s2, 1024, %s27, [#allocation4], 256, 256, 16
    $region13: #{tpu_custom_call.1} parent=1 // pred_fallthru
      _
    // Predicated region
    $region14: #{tpu_custom_call.1} parent=1 // pred_check
      _
    $region15: #{tpu_custom_call.1} parent=1 // pred_check_branch
      %34 = sbr.rel (0) target = $region17
    $region16: #{tpu_custom_call.1} parent=1 // pred_region
      _
    $region17: #{tpu_custom_call.1} parent=1 // pred_fallthru
      _
    // Predicated region
    $region18: #{tpu_custom_call.1} parent=1 // pred_check
      _
    $region19: #{tpu_custom_call.1} parent=1 // pred_check_branch
      %36 = sbr.rel (0) target = $region21
    $region20: #{tpu_custom_call.1} parent=1 // pred_region
      %s38 = ssub.s32 8192, 8192
      %39 = vsyncadd [#allocation7], %s38
      %s40 = sshll.u32 [#allocation6], 4
      %s41 = int_to_ptr.vmem [resolvable:$true] %s40
      %46 = dma.hbm_to_vmem [thread:$0]  %s4, 8192, %s41, [#allocation7], 256, 256, 16
    $region21: #{tpu_custom_call.1} parent=1 // pred_fallthru
      _
    // Predicated region
    $region22: #{tpu_custom_call.1} parent=1 // pred_check
      _
    $region23: #{tpu_custom_call.1} parent=1 // pred_check_branch
      %48 = sbr.rel (0) target = $region25
    $region24: #{tpu_custom_call.1} parent=1 // pred_region
      _
    $region25: #{tpu_custom_call.1} parent=1 // pred_fallthru
      _
    // Predicated region
    $region26: #{tpu_custom_call.1} parent=1 // pred_check
      _
    $region27: #{tpu_custom_call.1} parent=1 // pred_check_branch
      %50 = sbr.rel (0) target = $region29
    $region28: #{tpu_custom_call.1} parent=1 // pred_region
      _
    $region29: #{tpu_custom_call.1} parent=1 // pred_fallthru
      _
    // Predicated region
    $region30: #{tpu_custom_call.1} parent=1 // pred_check
      _
    $region31: #{tpu_custom_call.1} parent=1 // pred_check_branch
      %52 = sbr.rel (0) target = $region33
    $region32: #{tpu_custom_call.1} parent=1 // pred_region
      _
    $region33: #{tpu_custom_call.1} parent=1 // pred_fallthru
      _
    // Predicated region
    $region34: #{tpu_custom_call.1} parent=1 // pred_check
      _
    $region35: #{tpu_custom_call.1} parent=1 // pred_check_branch
      %54 = sbr.rel (0) target = $region37
    $region36: #{tpu_custom_call.1} parent=1 // pred_region
      %55 = dma.done [#allocation4], 1024
    $region37: #{tpu_custom_call.1} parent=1 // pred_fallthru
      _
    // Predicated region
    $region38: #{tpu_custom_call.1} parent=1 // pred_check
      _
    $region39: #{tpu_custom_call.1} parent=1 // pred_check_branch
      %57 = sbr.rel (0) target = $region41
    $region40: #{tpu_custom_call.1} parent=1 // pred_region
      %58 = dma.done [#allocation7], 8192
    $region41: #{tpu_custom_call.1} parent=1 // pred_fallthru
      _
    %v59 = vld [vmem:[%s0] sm:$0xff]
    %v60 = vld [vmem:[%s1] sm:$0xff]
    %62 = vrot.lane.b32.xlu0 %v60, 24
    %v63 = vpop.permute.xlu0 %62
    %vm65 = vcmask 195584
    %v66 = vsel %vm65, %v59, %v63
    %v67 = vld [vmem:[#allocation3] sm:$0xff]
    %v68 = vld [vmem:[#allocation3 + $0x8] sm:$0xff]
    %v69 = vld [vmem:[#allocation3 + $0x10] sm:$0xff]
    %v70 = vld [vmem:[#allocation3 + $0x18] sm:$0xff]
    %v71 = vld [vmem:[#allocation3 + $0x20] sm:$0xff]
    %v72 = vld [vmem:[#allocation3 + $0x28] sm:$0xff]
    %v73 = vld [vmem:[#allocation3 + $0x30] sm:$0xf]
    %v74 = vld [vmem:[#allocation3 + $0x38] sm:$0xf]
    %v75 = vld [vmem:[%s3] sm:$0x3]
    %v77 = vlaneseq
    %v78 = vshrl.u32 %v77, 7
    %v79 = vsub.s32 0, %v78
    %v80 = vrot.slane %v75, %v79
    %v81 = vlaneseq
    %v82 = vshrl.u32 %v81, 7
    %v83 = vsub.s32 1, %v82
    %v84 = vrot.slane %v75, %v83
    %vm87 = vcmask 228352
    %v89 = vsel %vm87, %v66, 0
    %vm91 = vcmask 1043456
    %v93 = vsel %vm91, %v73, 0
    %v96 = vsel %vm91, %v74, 0
    %98 = vmatprep.subr.mxu0 0.0
    %99 = vmatpush1.msra.mxu0 0.0
    %100 = vmatprep.subr.mxu0 0.0
    %101 = vmatpush1.msra.mxu0 0.0
    %102 = vmatprep.subr.mxu0 0.0
    %103 = vmatpush1.msra.mxu0 0.0
    %104 = vmatprep.subr.mxu0 0.0
    %105 = vmatpush1.msra.mxu0 0.0
    %106 = vmatprep.subr.mxu0 0.0
    %107 = vmatpush1.msra.mxu0 0.0
    %108 = vmatprep.subr.mxu0 0.0
    %109 = vmatpush1.msra.mxu0 0.0
    %110 = vmatprep.subr.mxu0 0.0
    %111 = vmatpush1.msra.mxu0 0.0
    %112 = vmatprep.subr.mxu0 0.0
    %113 = vmatpush1.msra.mxu0 0.0
    %114 = vmatprep.subr.mxu0 0.0
    %115 = vmatpush1.msra.mxu0 0.0
    %116 = vmatprep.subr.mxu0 0.0
    %117 = vmatpush1.msra.mxu0 0.0
    %118 = vmatprep.subr.mxu0 0.0
    %119 = vmatpush1.msra.mxu0 0.0
    %120 = vmatprep.subr.mxu0 0.0
    %121 = vmatpush1.msra.mxu0 0.0
    %122 = vmatprep.subr.mxu0 %v96
    %123 = vmatpush1.msra.mxu0 %v93
    %124 = vmatprep.subr.mxu0 %v72
    %125 = vmatpush1.msra.mxu0 %v71
    %126 = vmatprep.subr.mxu0 %v70
    %127 = vmatpush1.msra.mxu0 %v69
    %128 = vmatprep.subr.mxu0 %v68
    %129 = vmatpush1.msra.mxu0 %v67
    %130 = vmatprep.subr.mxu0 0.0
    %131 = vmatpush2.msra.mxu0 0.0
    %132 = vmatprep.subr.mxu0 0.0
    %133 = vmatpush2.msra.mxu0 0.0
    %134 = vmatprep.subr.mxu0 0.0
    %135 = vmatpush2.msra.mxu0 0.0
    %136 = vmatprep.subr.mxu0 0.0
    %137 = vmatpush2.msra.mxu0 0.0
    %138 = vmatprep.subr.mxu0 0.0
    %139 = vmatpush2.msra.mxu0 0.0
    %140 = vmatprep.subr.mxu0 0.0
    %141 = vmatpush2.msra.mxu0 0.0
    %142 = vmatprep.subr.mxu0 0.0
    %143 = vmatpush2.msra.mxu0 0.0
    %144 = vmatprep.subr.mxu0 0.0
    %145 = vmatpush2.msra.mxu0 0.0
    %146 = vmatprep.subr.mxu0 0.0
    %147 = vmatpush2.msra.mxu0 0.0
    %148 = vmatprep.subr.mxu0 0.0
    %149 = vmatpush2.msra.mxu0 0.0
    %150 = vmatprep.subr.mxu0 0.0
    %151 = vmatpush2.msra.mxu0 0.0
    %152 = vmatprep.subr.mxu0 0.0
    %153 = vmatpush2.msra.mxu0 0.0
    %154 = vmatprep.subr.mxu0 0.0
    %155 = vmatpush2.msra.mxu0 0.0
    %156 = vmatprep.subr.mxu0 0.0
    %157 = vmatpush2.msra.mxu0 0.0
    %158 = vmatprep.subr.mxu0 0.0
    %159 = vmatpush2.msra.mxu0 0.0
    %160 = vmatprep.subr.mxu0 0.0
    %161 = vmatpush2.msra.mxu0 0.0
    %162 = vmatprep.mubr.f32.mxu0 0.0
    %163 = vmatmul.mubr.f32.gmra.mxu0 %v89
    %v164 = vpop.f32.mrf.mxu0
    %v165 = vadd.f32 %v80, %v164
    %v166 = vpop.f32.mrf.mxu0
    %v167 = vadd.f32 %v84, %v166
    %168 = vdwg.mxu0
    %v169 = vmax.f32 %v165, 0.0
    %v170 = vmax.f32 %v167, 0.0
    %v171 = vld [vmem:[#allocation6] sm:$0xff]
    %v172 = vld [vmem:[#allocation6 + $0x8] sm:$0xff]
    %v173 = vld [vmem:[#allocation6 + $0x10] sm:$0xff]
    %v174 = vld [vmem:[#allocation6 + $0x18] sm:$0xff]
    %v175 = vld [vmem:[#allocation6 + $0x20] sm:$0xff]
    %v176 = vld [vmem:[#allocation6 + $0x28] sm:$0xff]
    %v177 = vld [vmem:[#allocation6 + $0x30] sm:$0xff]
    %v178 = vld [vmem:[#allocation6 + $0x38] sm:$0xff]
    %v179 = vld [vmem:[#allocation6 + $0x40] sm:$0xff]
    %v180 = vld [vmem:[#allocation6 + $0x48] sm:$0xff]
    %v181 = vld [vmem:[#allocation6 + $0x50] sm:$0xff]
    %v182 = vld [vmem:[#allocation6 + $0x58] sm:$0xff]
    %v183 = vld [vmem:[#allocation6 + $0x60] sm:$0xff]
    %v184 = vld [vmem:[#allocation6 + $0x68] sm:$0xff]
    %v185 = vld [vmem:[#allocation6 + $0x70] sm:$0xff]
    %v186 = vld [vmem:[#allocation6 + $0x78] sm:$0xff]
    %v187 = vld [vmem:[#allocation6 + $0x80] sm:$0xff]
    %v188 = vld [vmem:[#allocation6 + $0x88] sm:$0xff]
    %v189 = vld [vmem:[#allocation6 + $0x90] sm:$0xff]
    %v190 = vld [vmem:[#allocation6 + $0x98] sm:$0xff]
    %v191 = vld [vmem:[#allocation6 + $0xa0] sm:$0xff]
    %v192 = vld [vmem:[#allocation6 + $0xa8] sm:$0xff]
    %v193 = vld [vmem:[#allocation6 + $0xb0] sm:$0xff]
    %v194 = vld [vmem:[#allocation6 + $0xb8] sm:$0xff]
    %v195 = vld [vmem:[#allocation6 + $0xc0] sm:$0xff]
    %v196 = vld [vmem:[#allocation6 + $0xc8] sm:$0xff]
    %v197 = vld [vmem:[#allocation6 + $0xd0] sm:$0xff]
    %v198 = vld [vmem:[#allocation6 + $0xd8] sm:$0xff]
    %v199 = vld [vmem:[#allocation6 + $0xe0] sm:$0xff]
    %v200 = vld [vmem:[#allocation6 + $0xe8] sm:$0xff]
    %v201 = vld [vmem:[#allocation6 + $0xf0] sm:$0xff]
    %v202 = vld [vmem:[#allocation6 + $0xf8] sm:$0xff]
    %v203 = vld [vmem:[#allocation6 + $0x100] sm:$0xff]
    %v204 = vld [vmem:[#allocation6 + $0x108] sm:$0xff]
    %v205 = vld [vmem:[#allocation6 + $0x110] sm:$0xff]
    %v206 = vld [vmem:[#allocation6 + $0x118] sm:$0xff]
    %v207 = vld [vmem:[#allocation6 + $0x120] sm:$0xff]
    %v208 = vld [vmem:[#allocation6 + $0x128] sm:$0xff]
    %v209 = vld [vmem:[#allocation6 + $0x130] sm:$0xff]
    %v210 = vld [vmem:[#allocation6 + $0x138] sm:$0xff]
    %v211 = vld [vmem:[#allocation6 + $0x140] sm:$0xff]
    %v212 = vld [vmem:[#allocation6 + $0x148] sm:$0xff]
    %v213 = vld [vmem:[#allocation6 + $0x150] sm:$0xff]
    %v214 = vld [vmem:[#allocation6 + $0x158] sm:$0xff]
    %v215 = vld [vmem:[#allocation6 + $0x160] sm:$0xff]
    %v216 = vld [vmem:[#allocation6 + $0x168] sm:$0xff]
    %v217 = vld [vmem:[#allocation6 + $0x170] sm:$0xff]
    %v218 = vld [vmem:[#allocation6 + $0x178] sm:$0xff]
    %v219 = vld [vmem:[#allocation6 + $0x180] sm:$0xff]
    %v220 = vld [vmem:[#allocation6 + $0x188] sm:$0xff]
    %v221 = vld [vmem:[#allocation6 + $0x190] sm:$0xff]
    %v222 = vld [vmem:[#allocation6 + $0x198] sm:$0xff]
    %v223 = vld [vmem:[#allocation6 + $0x1a0] sm:$0xff]
    %v224 = vld [vmem:[#allocation6 + $0x1a8] sm:$0xff]
    %v225 = vld [vmem:[#allocation6 + $0x1b0] sm:$0xff]
    %v226 = vld [vmem:[#allocation6 + $0x1b8] sm:$0xff]
    %v227 = vld [vmem:[#allocation6 + $0x1c0] sm:$0xff]
    %v228 = vld [vmem:[#allocation6 + $0x1c8] sm:$0xff]
    %v229 = vld [vmem:[#allocation6 + $0x1d0] sm:$0xff]
    %v230 = vld [vmem:[#allocation6 + $0x1d8] sm:$0xff]
    %v231 = vld [vmem:[#allocation6 + $0x1e0] sm:$0xff]
    %v232 = vld [vmem:[#allocation6 + $0x1e8] sm:$0xff]
    %v233 = vld [vmem:[#allocation6 + $0x1f0] sm:$0xff]
    %v234 = vld [vmem:[#allocation6 + $0x1f8] sm:$0xff]
    %v235 = vld [vmem:[%s5] sm:$0x3]
    %v237 = vlaneseq
    %v238 = vshrl.u32 %v237, 7
    %v239 = vsub.s32 0, %v238
    %v240 = vrot.slane %v235, %v239
    %v241 = vlaneseq
    %v242 = vshrl.u32 %v241, 7
    %v243 = vsub.s32 1, %v242
    %v244 = vrot.slane %v235, %v243
    %247 = vmatprep.subr.mxu0 %v202
    %248 = vmatpush1.msra.mxu0 %v201
    %249 = vmatprep.subr.mxu0 %v200
    %250 = vmatpush1.msra.mxu0 %v199
    %251 = vmatprep.subr.mxu0 %v198
    %252 = vmatpush1.msra.mxu0 %v197
    %253 = vmatprep.subr.mxu0 %v196
    %254 = vmatpush1.msra.mxu0 %v195
    %255 = vmatprep.subr.mxu0 %v194
    %256 = vmatpush1.msra.mxu0 %v193
    %257 = vmatprep.subr.mxu0 %v192
    %258 = vmatpush1.msra.mxu0 %v191
    %259 = vmatprep.subr.mxu0 %v190
    %260 = vmatpush1.msra.mxu0 %v189
    %261 = vmatprep.subr.mxu0 %v188
    %262 = vmatpush1.msra.mxu0 %v187
    %263 = vmatprep.subr.mxu0 %v186
    %264 = vmatpush1.msra.mxu0 %v185
    %265 = vmatprep.subr.mxu0 %v184
    %266 = vmatpush1.msra.mxu0 %v183
    %267 = vmatprep.subr.mxu0 %v182
    %268 = vmatpush1.msra.mxu0 %v181
    %269 = vmatprep.subr.mxu0 %v180
    %270 = vmatpush1.msra.mxu0 %v179
    %271 = vmatprep.subr.mxu0 %v178
    %272 = vmatpush1.msra.mxu0 %v177
    %273 = vmatprep.subr.mxu0 %v176
    %274 = vmatpush1.msra.mxu0 %v175
    %275 = vmatprep.subr.mxu0 %v174
    %276 = vmatpush1.msra.mxu0 %v173
    %277 = vmatprep.subr.mxu0 %v172
    %278 = vmatpush1.msra.mxu0 %v171
    %279 = vmatprep.subr.mxu0 %v234
    %280 = vmatpush2.msra.mxu0 %v233
    %281 = vmatprep.subr.mxu0 %v232
    %282 = vmatpush2.msra.mxu0 %v231
    %283 = vmatprep.subr.mxu0 %v230
    %284 = vmatpush2.msra.mxu0 %v229
    %285 = vmatprep.subr.mxu0 %v228
    %286 = vmatpush2.msra.mxu0 %v227
    %287 = vmatprep.subr.mxu0 %v226
    %288 = vmatpush2.msra.mxu0 %v225
    %289 = vmatprep.subr.mxu0 %v224
    %290 = vmatpush2.msra.mxu0 %v223
    %291 = vmatprep.subr.mxu0 %v222
    %292 = vmatpush2.msra.mxu0 %v221
    %293 = vmatprep.subr.mxu0 %v220
    %294 = vmatpush2.msra.mxu0 %v219
    %295 = vmatprep.subr.mxu0 %v218
    %296 = vmatpush2.msra.mxu0 %v217
    %297 = vmatprep.subr.mxu0 %v216
    %298 = vmatpush2.msra.mxu0 %v215
    %299 = vmatprep.subr.mxu0 %v214
    %300 = vmatpush2.msra.mxu0 %v213
    %301 = vmatprep.subr.mxu0 %v212
    %302 = vmatpush2.msra.mxu0 %v211
    %303 = vmatprep.subr.mxu0 %v210
    %304 = vmatpush2.msra.mxu0 %v209
    %305 = vmatprep.subr.mxu0 %v208
    %306 = vmatpush2.msra.mxu0 %v207
    %307 = vmatprep.subr.mxu0 %v206
    %308 = vmatpush2.msra.mxu0 %v205
    %309 = vmatprep.subr.mxu0 %v204
    %310 = vmatpush2.msra.mxu0 %v203
    %311 = vmatprep.mubr.f32.mxu0 %v170
    %312 = vmatmul.mubr.f32.gmra.mxu0 %v169
    %v313 = vpop.f32.mrf.mxu0
    %v314 = vadd.f32 %v240, %v313
    %v315 = vpop.f32.mrf.mxu0
    %v316 = vadd.f32 %v244, %v315
    %317 = vdwg.mxu0
    %v318 = vmax.f32 %v314, 0.0
    %v319 = vmax.f32 %v316, 0.0
    %v320 = vld [vmem:[%s6] sm:$0x3]
    %v322 = vlaneseq
    %v323 = vshrl.u32 %v322, 7
    %v324 = vsub.s32 0, %v323
    %v325 = vrot.slane %v320, %v324
    %v326 = vlaneseq
    %v327 = vshrl.u32 %v326, 7
    %v328 = vsub.s32 1, %v327
    %v329 = vrot.slane %v320, %v328
    %v332 = vmul.f32 %v318, %v325
    %v333 = vmul.f32 %v319, %v329
    %v334 = vadd.f32 %v332, %v333
    %335 = vadd.xlane.f32.xlu0 %v334
    %v336 = vpop.xlane.xlu0 %335
    %s337 = sld [smem:[#allocation2]]
    %v338 = vstv %s337
    %v339 = vadd.f32 %v336, %v338
    %v341 = vlaneseq
    %v342 = vand.u32 %v341, 127
    %v343 = vlaneseq
    %v344 = vshrl.u32 %v343, 7
    %v345 = vsub.s32 %v342, %v344
    %v346 = vrot.slane %v339, %v345
    %vm348 = vcmask 57344
    %349 = vst.msk [vmem:[#allocation8] sm:$0x1] %vm348, %v346
    // Predicated region
    $region42: #{tpu_custom_call.1} parent=1 // pred_check
      _
    $region43: #{tpu_custom_call.1} parent=1 // pred_check_branch
      %351 = sbr.rel (0) target = $region45
    $region44: #{tpu_custom_call.1} parent=1 // pred_region
      %s353 = ssub.s32 16, 16
      %354 = vsyncadd [#allocation5], %s353
      %s356 = sshll.u32 [#allocation8], 4
      %s357 = int_to_ptr.vmem [resolvable:$true] %s356
      %359 = dma.vmem_to_hbm [thread:$0]  %s357, 16, %s8, [#allocation5]
    $region45: #{tpu_custom_call.1} parent=1 // pred_fallthru
      _
    // Predicated region
    $region46: #{tpu_custom_call.1} parent=1 // pred_check
      _
    $region47: #{tpu_custom_call.1} parent=1 // pred_check_branch
      %361 = sbr.rel (0) target = $region49
    $region48: #{tpu_custom_call.1} parent=1 // pred_region
      %362 = dma.done [#allocation5], 16
    $region49: #{tpu_custom_call.1} parent=1 // pred_fallthru
      _
    %363 = vsyncpa [#allocation4], 1
    %364 = vsyncpa [#allocation7], 1
    %365 = vsyncpa [#allocation5], 1

</llo_original>
